<compile_context>
chip_gen: v6e
topology: v6e:2x2x1
jax: 0.10.0
libtpu: 0.0.40
codegen_flags: <defaults>
</compile_context>

<pallas_src>
import jax
import jax.numpy as jnp
from jax import lax
from jax.experimental import pallas as pl
from jax.experimental.pallas import tpu as pltpu

HIDDEN = 32   # BERT model output size
SUBNUM = 2    # 2-class classification: is_next / is_not_next
BATCH = 8


# ----------------------------- Pallas kernels -----------------------------

def _progress_monitor_2class_kernel(x_ref, wd_ref, bd_ref, o_ref):
    """x:[B,H] VMEM, w_delta:[H,1] VMEM, b_delta:[1,1] SMEM -> o:[B,2] log-probs."""
    b, s = o_ref.shape
    # d = x @ (w1 - w0) + (b1 - b0): one MXU push + scalar add (bias read from SMEM).
    d = jnp.dot(x_ref[...], wd_ref[...],
                preferred_element_type=jnp.float32) + bd_ref[0, 0]        # [B, 1]
    # Column 0 gets +d, column 1 gets -d.
    col = lax.broadcasted_iota(jnp.int32, (b, s), 1)
    sign = jnp.where(col == 0, 1.0, -1.0)                                 # [B, 2]
    t = d * sign                                                          # [B, 2] = [d, -d]
    # log_softmax of two logits: logp = -softplus(t); stable softplus form.
    o_ref[...] = -(jnp.maximum(t, 0.0) + jnp.log1p(jnp.exp(-jnp.abs(t))))


def _progress_monitor_general_kernel(x_ref, w_ref, b_ref, o_ref):
    """General-S fallback (unused for the 2-class module): fused linear + log-softmax."""
    logits = jnp.dot(x_ref[...], w_ref[...],
                     preferred_element_type=jnp.float32) + b_ref[...]
    m = jnp.max(logits, axis=-1, keepdims=True)
    z = logits - m
    o_ref[...] = z - jnp.log(jnp.sum(jnp.exp(z), axis=-1, keepdims=True))


# ----------------------------- wrappers ------------------------------------

def prepare_2class_params(w, b):
    """One-time (init-time) prep, NOT in the hot path.

    w: [H, 2] (= linear.weight.T), b: [2] or [1, 2]
    -> (w_delta [H, 1], b_delta [1, 1]) with delta = class1 - class0.
    """
    b = jnp.reshape(b, (1, -1)).astype(jnp.float32)
    w = w.astype(jnp.float32)
    return w[:, 1:2] - w[:, 0:1], b[:, 1:2] - b[:, 0:1]


def progress_monitor(x, w_delta, b_delta):
    """x: [B, H] f32, w_delta: [H, 1] f32, b_delta: [1, 1] f32 -> [B, 2] f32 log-probs."""
    n, h = x.shape
    s = SUBNUM
    cost = pl.CostEstimate(
        flops=2 * n * h,                       # single matvec
        transcendentals=2 * n * s,             # exp + log1p per output element
        bytes_accessed=4 * (n * h + h + 1 + n * s),
    )
    return pl.pallas_call(
        _progress_monitor_2class_kernel,
        out_shape=jax.ShapeDtypeStruct((n, s), jnp.float32),
        in_specs=[
            pl.BlockSpec((n, h), lambda: (0, 0)),                       # x, VMEM resident
            pl.BlockSpec((h, 1), lambda: (0, 0)),                       # w_delta, VMEM
            pl.BlockSpec(memory_space=pltpu.MemorySpace.SMEM),          # b_delta scalar
        ],
        out_specs=pl.BlockSpec((n, s), lambda: (0, 0)),
        cost_estimate=cost,
    )(x, w_delta, b_delta)


def progress_monitor_general(x, w, b):
    """Fallback for subnum != 2 (keeps full module generality). Not used in main."""
    n, h = x.shape
    s = w.shape[1]
    return pl.pallas_call(
        _progress_monitor_general_kernel,
        out_shape=jax.ShapeDtypeStruct((n, s), jnp.float32),
        in_specs=[pl.BlockSpec((n, h), lambda: (0, 0)),
                  pl.BlockSpec((h, s), lambda: (0, 0)),
                  pl.BlockSpec((1, s), lambda: (0, 0))],
        out_specs=pl.BlockSpec((n, s), lambda: (0, 0)),
    )(x, w, jnp.reshape(b, (1, s)))


# ----------------------------- parameters ----------------------------------

def init_params(key):
    kw, kb = jax.random.split(key, 2)
    bound = 1.0 / jnp.sqrt(jnp.float32(HIDDEN))   # nn.Linear default init range
    return {
        # stored as [in_features, out_features] == linear.weight.T
        "w": jax.random.uniform(kw, (HIDDEN, SUBNUM), jnp.float32, -bound, bound),
        "b": jax.random.uniform(kb, (1, SUBNUM), jnp.float32, -bound, bound),
    }


# ----------------------------- main ------------------------------------------

if __name__ == "__main__":
    key = jax.random.PRNGKey(0)
    kp, kx = jax.random.split(key, 2)
    params = init_params(kp)

    # One-time parameter prep (outside the per-step hot path).
    w_delta, b_delta = prepare_2class_params(params["w"], params["b"])

    x = jax.random.normal(kx, (BATCH, HIDDEN), jnp.float32)

    out = progress_monitor(x, w_delta, b_delta)
    out = jax.block_until_ready(out)

    assert out.shape == (BATCH, SUBNUM)
    assert bool(jnp.all(jnp.isfinite(out)))

    # Correctness vs. the pure-JAX reference of the PyTorch module.
    ref = jax.nn.log_softmax(x @ params["w"] + params["b"], axis=-1)
    assert bool(jnp.allclose(out, ref, atol=1e-5, rtol=1e-5))

    # Log-probs must exponentiate to a proper distribution over the 2 classes.
    assert bool(jnp.allclose(jnp.sum(jnp.exp(out), axis=-1), 1.0, atol=1e-5))

    print("KERNEL_OK")
</pallas_src>

<mosaic_0001>
module attributes {stable_mosaic.version = 11 : i64} {
  func.func @_progress_monitor_2class_kernel(%arg0: memref<8x32xf32, #tpu.memory_space<vmem>>, %arg1: memref<32x1xf32, #tpu.memory_space<vmem>>, %arg2: memref<1x1xf32, #tpu.memory_space<smem>>, %arg3: memref<8x2xf32, #tpu.memory_space<vmem>>) attributes {dimension_semantics = [], scalar_prefetch = 0 : i64, scratch_operands = 0 : i64, tpu.core_type = #tpu.core_type<tc>} {
    %c0 = arith.constant 0 : index
    %c0_0 = arith.constant 0 : index
    %0 = vector.load %arg0[%c0, %c0_0] : memref<8x32xf32, #tpu.memory_space<vmem>>, vector<8x32xf32>
    %c0_1 = arith.constant 0 : index
    %c0_2 = arith.constant 0 : index
    %1 = vector.load %arg1[%c0_1, %c0_2] : memref<32x1xf32, #tpu.memory_space<vmem>>, vector<32x1xf32>
    %cst = arith.constant dense<0.000000e+00> : vector<8x1xf32>
    %2 = tpu.matmul %0, %1, %cst {dimension_numbers = #tpu.dot_dimension_numbers<[1], [0], [0], [1], [0, 0, 1, 1], [], []>} : vector<8x32xf32>, vector<32x1xf32>, vector<8x1xf32> -> vector<8x1xf32>
    %c0_3 = arith.constant 0 : index
    %c0_4 = arith.constant 0 : index
    %3 = memref.load %arg2[%c0_3, %c0_4] : memref<1x1xf32, #tpu.memory_space<smem>>
    %4 = vector.broadcast %3 : f32 to vector<8x1xf32>
    %5 = arith.addf %2, %4 : vector<8x1xf32>
    %6 = tpu.iota {dimensions = array<i32: 1>} : vector<8x2xi32>
    %c0_i32 = arith.constant 0 : i32
    %7 = vector.broadcast %c0_i32 : i32 to vector<8x2xi32>
    %8 = arith.cmpi eq, %6, %7 : vector<8x2xi32>
    %cst_5 = arith.constant 1.000000e+00 : f32
    %cst_6 = arith.constant -1.000000e+00 : f32
    %9 = vector.broadcast %cst_5 : f32 to vector<8x2xf32>
    %10 = vector.broadcast %cst_6 : f32 to vector<8x2xf32>
    %11 = arith.select %8, %9, %10 : vector<8x2xi1>, vector<8x2xf32>
    %12 = vector.broadcast %5 : vector<8x1xf32> to vector<8x2xf32>
    %13 = arith.mulf %12, %11 : vector<8x2xf32>
    %cst_7 = arith.constant 0.000000e+00 : f32
    %14 = vector.broadcast %cst_7 : f32 to vector<8x2xf32>
    %15 = arith.maximumf %13, %14 : vector<8x2xf32>
    %16 = math.absf %13 : vector<8x2xf32>
    %cst_8 = arith.constant 0.000000e+00 : f32
    %17 = vector.broadcast %cst_8 : f32 to vector<8x2xf32>
    %18 = arith.subf %17, %16 : vector<8x2xf32>
    %19 = math.exp %18 : vector<8x2xf32>
    %20 = math.log1p %19 : vector<8x2xf32>
    %21 = arith.addf %15, %20 : vector<8x2xf32>
    %cst_9 = arith.constant 0.000000e+00 : f32
    %22 = vector.broadcast %cst_9 : f32 to vector<8x2xf32>
    %23 = arith.subf %22, %21 : vector<8x2xf32>
    %c0_10 = arith.constant 0 : index
    %c0_11 = arith.constant 0 : index
    %24 = vector.load %arg3[%c0_10, %c0_11] : memref<8x2xf32, #tpu.memory_space<vmem>>, vector<8x2xf32>
    tpu.vector_store %arg3[%c0_10, %c0_11], %23 {strides = array<i32>} : memref<8x2xf32, #tpu.memory_space<vmem>>, vector<8x2xf32>,
    return
  }
}

</mosaic_0001>

<llo_original>
// kernel: tpu_custom_call.1
$region0: #{tpu_custom_call.1}
  #allocation0 [shape = 'u32[]', space=smem, size = 0x4, offset = 0x4, fixed_abs, tag = 'smem constant byte address 0x4 - core index']
  #allocation1 [shape = 'u32[144,128]{1,0:T(1,128)}', space=vmem, size = 0x12000, scoped, tag = 'internal scratch']
  #allocation2 [shape = 'f32[1,1]{1,0:T(1,128)S(6)}', space=smem, size = 0x200, scoped, tag = 'scoped memory for tpu_custom_call.1']
  %s0 = inlined_call_operand.vmem [shape: f32[8,32], index: 0, kind: input, shape index: {}]
  %s1 = inlined_call_operand.vmem [shape: f32[32,1], index: 1, kind: input, shape index: {}]
  %s2 = inlined_call_operand.<no memory space> [shape: f32[1,1], index: 2, kind: input, shape index: {}]
  %s3 = inlined_call_operand.vmem [shape: f32[8,2], index: 3, kind: output, shape index: {}]
  %s4 = sld [smem:[#allocation0]]
  $region22: #{tpu_custom_call.1} parent=0
    _
  %s6 = ssub.s32 1, %s4
  %s7 = scalar_select 0, %s6, %s4
  %8 = sst [smem:[#allocation2]] %s2
  // Predicated region
  $region2: #{tpu_custom_call.1} parent=0 // pred_check
    _
  $region3: #{tpu_custom_call.1} parent=0 // pred_check_branch
    %10 = sbr.rel (0) target = $region5
  $region4: #{tpu_custom_call.1} parent=0 // pred_region
    _
  $region5: #{tpu_custom_call.1} parent=0 // pred_fallthru
    _
  // Predicated region
  $region6: #{tpu_custom_call.1} parent=0 // pred_check
    _
  $region7: #{tpu_custom_call.1} parent=0 // pred_check_branch
    %12 = sbr.rel (0) target = $region9
  $region8: #{tpu_custom_call.1} parent=0 // pred_region
    _
  $region9: #{tpu_custom_call.1} parent=0 // pred_fallthru
    _
  // Predicated region
  $region10: #{tpu_custom_call.1} parent=0 // pred_check
    _
  $region11: #{tpu_custom_call.1} parent=0 // pred_check_branch
    %14 = sbr.rel (0) target = $region13
  $region12: #{tpu_custom_call.1} parent=0 // pred_region
    _
  $region13: #{tpu_custom_call.1} parent=0 // pred_fallthru
    _
  %v15 = vld [vmem:[%s0] sm:$0xff]
  %v16 = vld [vmem:[%s1] sm:$0xff]
  %v17 = vld [vmem:[%s1 + $0x8] sm:$0xff]
  %v18 = vld [vmem:[%s1 + $0x10] sm:$0xff]
  %v19 = vld [vmem:[%s1 + $0x18] sm:$0xff]
  %s20 = sld [smem:[#allocation2]]
  %v21 = vstv %s20
  %vm22 = vcmask 261120
  %v24 = vsel %vm22, %v15, 0
  %26 = vmatprep.subr.mxu0 0.0
  %27 = vmatpush1.msra.mxu0 0.0
  %28 = vmatprep.subr.mxu0 0.0
  %29 = vmatpush1.msra.mxu0 0.0
  %30 = vmatprep.subr.mxu0 0.0
  %31 = vmatpush1.msra.mxu0 0.0
  %32 = vmatprep.subr.mxu0 0.0
  %33 = vmatpush1.msra.mxu0 0.0
  %34 = vmatprep.subr.mxu0 0.0
  %35 = vmatpush1.msra.mxu0 0.0
  %36 = vmatprep.subr.mxu0 0.0
  %37 = vmatpush1.msra.mxu0 0.0
  %38 = vmatprep.subr.mxu0 0.0
  %39 = vmatpush1.msra.mxu0 0.0
  %40 = vmatprep.subr.mxu0 0.0
  %41 = vmatpush1.msra.mxu0 0.0
  %42 = vmatprep.subr.mxu0 0.0
  %43 = vmatpush1.msra.mxu0 0.0
  %44 = vmatprep.subr.mxu0 0.0
  %45 = vmatpush1.msra.mxu0 0.0
  %46 = vmatprep.subr.mxu0 0.0
  %47 = vmatpush1.msra.mxu0 0.0
  %48 = vmatprep.subr.mxu0 0.0
  %49 = vmatpush1.msra.mxu0 0.0
  %50 = vmatprep.subr.mxu0 0.0
  %51 = vmatpush1.msra.mxu0 %v19
  %52 = vmatprep.subr.mxu0 0.0
  %53 = vmatpush1.msra.mxu0 %v18
  %54 = vmatprep.subr.mxu0 0.0
  %55 = vmatpush1.msra.mxu0 %v17
  %56 = vmatprep.subr.mxu0 0.0
  %57 = vmatpush1.msra.mxu0 %v16
  %58 = vmatprep.subr.mxu0 0.0
  %59 = vmatpush2.msra.mxu0 0.0
  %60 = vmatprep.subr.mxu0 0.0
  %61 = vmatpush2.msra.mxu0 0.0
  %62 = vmatprep.subr.mxu0 0.0
  %63 = vmatpush2.msra.mxu0 0.0
  %64 = vmatprep.subr.mxu0 0.0
  %65 = vmatpush2.msra.mxu0 0.0
  %66 = vmatprep.subr.mxu0 0.0
  %67 = vmatpush2.msra.mxu0 0.0
  %68 = vmatprep.subr.mxu0 0.0
  %69 = vmatpush2.msra.mxu0 0.0
  %70 = vmatprep.subr.mxu0 0.0
  %71 = vmatpush2.msra.mxu0 0.0
  %72 = vmatprep.subr.mxu0 0.0
  %73 = vmatpush2.msra.mxu0 0.0
  %74 = vmatprep.subr.mxu0 0.0
  %75 = vmatpush2.msra.mxu0 0.0
  %76 = vmatprep.subr.mxu0 0.0
  %77 = vmatpush2.msra.mxu0 0.0
  %78 = vmatprep.subr.mxu0 0.0
  %79 = vmatpush2.msra.mxu0 0.0
  %80 = vmatprep.subr.mxu0 0.0
  %81 = vmatpush2.msra.mxu0 0.0
  %82 = vmatprep.subr.mxu0 0.0
  %83 = vmatpush2.msra.mxu0 0.0
  %84 = vmatprep.subr.mxu0 0.0
  %85 = vmatpush2.msra.mxu0 0.0
  %86 = vmatprep.subr.mxu0 0.0
  %87 = vmatpush2.msra.mxu0 0.0
  %88 = vmatprep.subr.mxu0 0.0
  %89 = vmatpush2.msra.mxu0 0.0
  %90 = vmatprep.mubr.f32.mxu0 0.0
  %91 = vmatmul.mubr.f32.gmra.mxu0 %v24
  %v92 = vpop.f32.mrf.mxu0
  %v93 = vadd.f32 %v21, %v92
  %v94 = vpop.f32.mrf.mxu0
  %95 = vdwg.mxu0
  %v96 = vlaneseq
  %v97 = vand.u32 %v96, 127
  %vm98 = vcmp.eq.s32.totalorder %v97, 0
  %v99 = vsel %vm98, 1.0, -1.0
  %101 = vset.pattern.permute.xlu0 0
  %102 = vperm.xlu0 %101, %v93
  %v103 = vpop.permute.xlu0 %102
  %v105 = vmul.f32 %v103, %v99
  %v106 = vmax.f32 %v105, 0.0
  %v107 = vand.u32 2147483647, %v105
  %v108 = vsub.f32 0.0, %v107
  %v109 = vmul.f32 %v108, 1.442695
  %v110 = vpow.pop %v109
  %v111 = vadd.f32 %v110, 1.0
  %v112 = vlog2.pop %v111
  %v113 = vmul.f32 %v112, 0.6931472
  %v114 = vmul.f32 -0.5, %v110
  %v115 = vadd.f32 %v114, 1.0
  %v116 = vmul.f32 %v115, %v110
  %v117 = vand.u32 2147483647, %v110
  %vm118 = vcmp.lt.f32.partialorder %v117, 0.0004427343
  %v119 = vsel %vm118, %v116, %v113
  %v120 = vadd.f32 %v106, %v119
  %v121 = vsub.f32 0.0, %v120
  %vm122 = vcmask 15360
  %123 = vst.msk [vmem:[%s3] sm:$0xff] %vm122, %v121
  // Predicated region
  $region14: #{tpu_custom_call.1} parent=0 // pred_check
    _
  $region15: #{tpu_custom_call.1} parent=0 // pred_check_branch
    %125 = sbr.rel (0) target = $region17
  $region16: #{tpu_custom_call.1} parent=0 // pred_region
    _
  $region17: #{tpu_custom_call.1} parent=0 // pred_fallthru
    _
  // Predicated region
  $region18: #{tpu_custom_call.1} parent=0 // pred_check
    _
  $region19: #{tpu_custom_call.1} parent=0 // pred_check_branch
    %127 = sbr.rel (0) target = $region21
  $region20: #{tpu_custom_call.1} parent=0 // pred_region
    _
  $region21: #{tpu_custom_call.1} parent=0 // pred_fallthru
    _

</llo_original>
